<compile_context>
chip_gen: v7x
topology: tpu7x:2x2x1
jax: 0.10.0
libtpu: 0.0.40
codegen_flags: <defaults>
</compile_context>

<pallas_src>
import functools

import numpy as np
import jax
import jax.numpy as jnp
from jax import lax
from jax.experimental import pallas as pl
from jax.experimental.pallas import tpu as pltpu


_LANE = 128
_SUBLANE = 8
_NEG = -1e30          # "removed / invalid" sentinel for candidate values
_NEG_GUARD = -1e29
_BIG = 2 ** 30        # index sentinel


def _round_up(x, m):
    return (x + m - 1) // m * m


def _pad2d(x, rows, cols):
    pr, pc = rows - x.shape[0], cols - x.shape[1]
    if pr == 0 and pc == 0:
        return x
    return jnp.pad(x, ((0, pr), (0, pc)))


def _nc_tiling(nc, max_tile_nc):
    tile = min(max_tile_nc, _round_up(max(nc, _LANE), _LANE))
    return tile, _round_up(max(nc, _LANE), tile)


def _nu_tiling(nu, max_tile_nu=128):
    nu_pad = _round_up(max(nu, _SUBLANE), _SUBLANE)
    if nu_pad <= max_tile_nu:
        return nu_pad, nu_pad
    return max_tile_nu, _round_up(nu_pad, max_tile_nu)


# ======================================================================================
# One-time corpus preparation (NC-blocked): encode + L2-normalize the cached queries
# with both "models", emit bf16 embeddings pre-transposed to [D, NC_pad].
# ======================================================================================
def _encode_corpus_kernel(cf_ref, w2_ref, cr_T_ref, cn_T_ref, *, emb_dim):
    # bf16 MXU operands, f32 accumulation (one fused (tile_nc, H) x (H, 2D) pass)
    e = jnp.dot(cf_ref[...], w2_ref[...], preferred_element_type=jnp.float32)
    er = e[:, :emb_dim]
    en = e[:, emb_dim:]
    er = er * lax.rsqrt(jnp.maximum(jnp.sum(er * er, axis=-1, keepdims=True), 1e-24))
    en = en * lax.rsqrt(jnp.maximum(jnp.sum(en * en, axis=-1, keepdims=True), 1e-24))
    cr_T_ref[...] = jnp.transpose(er).astype(jnp.bfloat16)      # (D, tile_nc)
    cn_T_ref[...] = jnp.transpose(en).astype(jnp.bfloat16)


@functools.partial(jax.jit, static_argnames=("max_tile_nc",))
def encode_corpus(cached_feats, w_recall, w_nli, *, max_tile_nc=512):
    nc, h = cached_feats.shape
    d = w_recall.shape[1]
    assert h % _LANE == 0 and d % _LANE == 0
    tile_nc, nc_pad = _nc_tiling(nc, max_tile_nc)

    cf = _pad2d(cached_feats, nc_pad, h).astype(jnp.bfloat16)
    w2 = jnp.concatenate([w_recall, w_nli], axis=1).astype(jnp.bfloat16)   # (H, 2D)

    return pl.pallas_call(
        functools.partial(_encode_corpus_kernel, emb_dim=d),
        out_shape=(jax.ShapeDtypeStruct((d, nc_pad), jnp.bfloat16),
                   jax.ShapeDtypeStruct((d, nc_pad), jnp.bfloat16)),
        grid_spec=pltpu.PrefetchScalarGridSpec(
            num_scalar_prefetch=0,
            grid=(nc_pad // tile_nc,),
            in_specs=[pl.BlockSpec((tile_nc, h), lambda i: (i, 0)),
                      pl.BlockSpec((h, 2 * d), lambda i: (0, 0))],
            out_specs=(pl.BlockSpec((d, tile_nc), lambda i: (0, i)),
                       pl.BlockSpec((d, tile_nc), lambda i: (0, i)))),
        compiler_params=pltpu.CompilerParams(
            dimension_semantics=("parallel",),
            vmem_limit_bytes=32 * 1024 * 1024),
    )(cf, w2)


# ======================================================================================
# Fused, NC-blocked search kernel with a streaming top-`top` accumulator.
# ======================================================================================
def _search_fused_kernel(uf_ref, w2_ref, cr_T_ref, cn_T_ref,
                         scores_ref, islab_ref, fslab_ref,
                         ur_s, un_s, acc_val, acc_idx, acc_nli,
                         *, top, recall_rate, top_rate, nc_valid, emb_dim):
    j = pl.program_id(1)
    lane = lax.broadcasted_iota(jnp.int32, acc_val.shape, 1)          # (tnu, LANE)

    # --- once per user block: fused user encode, cached as bf16; reset accumulator ---
    @pl.when(j == 0)
    def _init():
        e = jnp.dot(uf_ref[...], w2_ref[...], preferred_element_type=jnp.float32)
        ur = e[:, :emb_dim]
        un = e[:, emb_dim:]
        ur = ur * lax.rsqrt(jnp.maximum(jnp.sum(ur * ur, axis=-1, keepdims=True), 1e-24))
        un = un * lax.rsqrt(jnp.maximum(jnp.sum(un * un, axis=-1, keepdims=True), 1e-24))
        ur_s[...] = ur.astype(jnp.bfloat16)
        un_s[...] = un.astype(jnp.bfloat16)
        acc_val[...] = jnp.full(acc_val.shape, _NEG, jnp.float32)
        acc_idx[...] = jnp.full(acc_idx.shape, -1, jnp.int32)
        acc_nli[...] = jnp.zeros(acc_nli.shape, jnp.float32)

    # --- per nc-block cosine scores: bf16 MXU operands, f32 accumulation ---
    rec = jnp.dot(ur_s[...], cr_T_ref[...], preferred_element_type=jnp.float32)  # (tnu,tnc)
    nli = jnp.dot(un_s[...], cn_T_ref[...], preferred_element_type=jnp.float32)
    scores_ref[...] = rec
    # TODO(synk): optionally emit scores as bf16 to halve the writeback on v5e.

    tnu, tnc = rec.shape
    col = j * tnc + lax.broadcasted_iota(jnp.int32, (tnu, tnc), 1)    # global column ids
    work = jnp.where(col < nc_valid, rec, _NEG)                       # mask pad columns

    # --- block-local top-`top` candidates (distinct positions), staged in lanes [top, 2*top) ---
    wval = acc_val[...]
    widx = acc_idx[...]
    wnli = acc_nli[...]
    for t in range(top):                                              # static unroll, `top` tiny
        ms = jnp.max(work, axis=-1, keepdims=True)
        fi = jnp.min(jnp.where(work == ms, col, _BIG), axis=-1, keepdims=True)
        hit = col == fi
        ok = ms > _NEG_GUARD
        sel_nli = jnp.sum(jnp.where(hit, nli, 0.0), axis=-1, keepdims=True)
        stage = lane == (top + t)
        wval = jnp.where(stage, jnp.where(ok, ms, _NEG), wval)
        widx = jnp.where(stage, jnp.where(ok, fi, -1), widx)
        wnli = jnp.where(stage, jnp.where(ok, sel_nli, 0.0), wnli)
        work = jnp.where(hit, _NEG, work)

    # --- merge 2*top-wide pool back down to the running global top-`top` (lanes [0, top)) ---
    pv = jnp.where(lane < 2 * top, wval, _NEG)
    nval = jnp.full_like(wval, _NEG)
    nidx = jnp.full_like(widx, -1)
    nnli = jnp.zeros_like(wnli)
    for t in range(top):
        ms = jnp.max(pv, axis=-1, keepdims=True)
        fi = jnp.min(jnp.where(pv == ms, widx, _BIG), axis=-1, keepdims=True)
        pick = (pv == ms) & (widx == fi)                              # (value desc, index asc)
        ok = ms > _NEG_GUARD
        sel_nli = jnp.sum(jnp.where(pick, wnli, 0.0), axis=-1, keepdims=True)
        tsel = lane == t
        nval = jnp.where(tsel, jnp.where(ok, ms, _NEG), nval)
        nidx = jnp.where(tsel, jnp.where(ok, fi, -1), nidx)
        nnli = jnp.where(tsel, jnp.where(ok, sel_nli, 0.0), nnli)
        pv = jnp.where(pick, _NEG, pv)
    acc_val[...] = nval
    acc_idx[...] = nidx
    acc_nli[...] = nnli

    # --- last nc block: torch-style threshold-gated selection + NLI winner ---
    @pl.when(j == pl.num_programs(1) - 1)
    def _final():
        pool_val = jnp.where(lane < top, nval, _NEG)
        pool_idx = nidx
        pool_nli = nnli
        out_idx = jnp.full_like(pool_idx, -1)
        out_val = jnp.zeros_like(pool_val)
        best_nli = jnp.full((tnu, 1), _NEG, jnp.float32)
        best_idx = jnp.full((tnu, 1), -1, jnp.int32)
        for t in range(top):
            ms = jnp.max(pool_val, axis=-1, keepdims=True)
            fi = jnp.min(jnp.where(pool_val == ms, pool_idx, _BIG), axis=-1, keepdims=True)
            pick = (pool_val == ms) & (pool_idx == fi)
            valid = ms >= recall_rate
            sel_nli = jnp.sum(jnp.where(pick, pool_nli, 0.0), axis=-1, keepdims=True)
            tsel = lane == t
            out_idx = jnp.where(tsel, jnp.where(valid, fi, -1), out_idx)
            out_val = jnp.where(tsel, jnp.where(valid, ms, 0.0), out_val)
            # strict '>' keeps the earliest rank on exact ties == list.index() in the ref
            better = valid & (sel_nli > best_nli)
            best_nli = jnp.where(better, sel_nli, best_nli)
            best_idx = jnp.where(better, fi, best_idx)
            # mimic `tmp_score[idx] = 0` (only when the selection succeeded; for
            # recall_rate <= 0 the zeroed entry may be re-selected, same as the ref).
            pool_val = jnp.where(pick & valid, 0.0, pool_val)
        ok_top = (best_idx >= 0) & (best_nli >= top_rate)
        wsel = lane == top                       # winner packed into lane `top`
        islab_ref[...] = jnp.where(wsel, jnp.where(ok_top, best_idx, -1), out_idx)
        fslab_ref[...] = jnp.where(wsel, jnp.where(ok_top, best_nli, 0.0), out_val)


@functools.partial(jax.jit, static_argnames=("top", "recall_rate", "top_rate",
                                              "num_cached", "max_tile_nc"))
def search_cached_qa_forward(user_feats, corpus, w_recall, w_nli, *,
                             top, recall_rate, top_rate, num_cached, max_tile_nc=512):
    c_recall_T, c_nli_T = corpus
    nu, h = user_feats.shape
    d, nc_pad = c_recall_T.shape
    assert h % _LANE == 0 and d % _LANE == 0
    assert 0 < top < _LANE
    tile_nc, nc_pad_expect = _nc_tiling(num_cached, max_tile_nc)
    assert nc_pad == nc_pad_expect, "corpus must be encoded with the same max_tile_nc"
    tile_nu, nu_pad = _nu_tiling(nu)

    uf = _pad2d(user_feats, nu_pad, h)
    w2 = jnp.concatenate([w_recall, w_nli], axis=1)        # (H, 2D); user encode stays f32

    kernel = functools.partial(
        _search_fused_kernel, top=top, recall_rate=float(recall_rate),
        top_rate=float(top_rate), nc_valid=num_cached, emb_dim=d)

    grid = (nu_pad // tile_nu, nc_pad // tile_nc)
    scores, islab, fslab = pl.pallas_call(
        kernel,
        out_shape=(
            jax.ShapeDtypeStruct((nu_pad, nc_pad), jnp.float32),   # full dot-score matrix
            jax.ShapeDtypeStruct((nu_pad, _LANE), jnp.int32),      # lanes[0,top)=rank idx, lane top=winner idx
            jax.ShapeDtypeStruct((nu_pad, _LANE), jnp.float32),    # lanes[0,top)=rank score, lane top=winner NLI
        ),
        grid_spec=pltpu.PrefetchScalarGridSpec(
            num_scalar_prefetch=0,
            grid=grid,
            in_specs=[pl.BlockSpec((tile_nu, h), lambda i, j: (i, 0)),
                      pl.BlockSpec((h, 2 * d), lambda i, j: (0, 0)),
                      pl.BlockSpec((d, tile_nc), lambda i, j: (0, j)),
                      pl.BlockSpec((d, tile_nc), lambda i, j: (0, j))],
            out_specs=(pl.BlockSpec((tile_nu, tile_nc), lambda i, j: (i, j)),
                       pl.BlockSpec((tile_nu, _LANE), lambda i, j: (i, 0)),
                       pl.BlockSpec((tile_nu, _LANE), lambda i, j: (i, 0))),
            scratch_shapes=[pltpu.VMEM((tile_nu, d), jnp.bfloat16),    # cached user recall emb
                            pltpu.VMEM((tile_nu, d), jnp.bfloat16),    # cached user NLI emb
                            pltpu.VMEM((tile_nu, _LANE), jnp.float32),  # streaming top-k values
                            pltpu.VMEM((tile_nu, _LANE), jnp.int32),    # streaming top-k indices
                            pltpu.VMEM((tile_nu, _LANE), jnp.float32)]),  # their NLI scores
        compiler_params=pltpu.CompilerParams(
            dimension_semantics=("parallel", "arbitrary"),
            vmem_limit_bytes=32 * 1024 * 1024),
    )(uf, w2, c_recall_T, c_nli_T)

    return {
        "rank_scores": scores[:nu, :num_cached],     # full dot-score matrix (return_score path)
        "rank_idx": islab[:nu, :top],                # indices into cached_queries (-1 == empty)
        "rank_sel_scores": fslab[:nu, :top],
        "top_idx": islab[:nu, top:top + 1],          # NLI winner index (-1 == None)
        "top_score": fslab[:nu, top:top + 1],
    }


# ======================================================================================
# Demo / checks
# ======================================================================================
def _ref_scores(xu, xc, w):
    hp = lax.Precision.HIGHEST
    u = jnp.dot(xu, w, precision=hp)
    c = jnp.dot(xc, w, precision=hp)
    u = u / jnp.linalg.norm(u, axis=-1, keepdims=True)
    c = c / jnp.linalg.norm(c, axis=-1, keepdims=True)
    return jnp.dot(u, c.T, precision=hp)


def _replay_rank(scores_row, top, thr):
    tmp = scores_row.tolist()
    want = []
    for _ in range(top):
        ms = max(tmp)
        if ms < thr:
            break
        idx = tmp.index(ms)
        tmp[idx] = 0.0
        want.append(idx)
    return want


def _run_case(key, nu, nc, h, d, top, recall_rate, top_rate, max_tile_nc):
    k1, k2, k3, k4 = jax.random.split(key, 4)
    user_feats = jax.random.normal(k1, (nu, h), jnp.float32)
    cached_feats = jax.random.normal(k2, (nc, h), jnp.float32)
    w_recall = jax.random.normal(k3, (h, d), jnp.float32) / jnp.sqrt(jnp.float32(h))
    w_nli = jax.random.normal(k4, (h, d), jnp.float32) / jnp.sqrt(jnp.float32(h))

    corpus = jax.block_until_ready(
        encode_corpus(cached_feats, w_recall, w_nli, max_tile_nc=max_tile_nc))
    out = jax.block_until_ready(
        search_cached_qa_forward(user_feats, corpus, w_recall, w_nli,
                                 top=top, recall_rate=recall_rate, top_rate=top_rate,
                                 num_cached=nc, max_tile_nc=max_tile_nc))

    # (1) cosine-score hot path vs exact-f32 reference (kernel uses bf16 MXU operands)
    ref = _ref_scores(user_feats, cached_feats, w_recall)
    err = float(jnp.max(jnp.abs(out["rank_scores"] - ref)))
    assert err < 2e-2, err

    # (2) replay the torch-style selection loop on the kernel's own scores: checks the
    #     blocked/streamed top-k + recall_rate gating bit-exactly.
    sc = np.asarray(out["rank_scores"], dtype=np.float32)
    thr = float(np.float32(recall_rate))
    for i in range(nu):
        want = _replay_rank(sc[i], top, thr)
        got = [int(v) for v in np.asarray(out["rank_idx"][i]) if v >= 0]
        assert got == want, (i, got, want)

    # (3) NLI winner vs a reference using the same quantization recipe as the kernel.
    un = jnp.dot(user_feats, w_nli, precision=lax.Precision.HIGHEST)
    un = un * lax.rsqrt(jnp.maximum(jnp.sum(un * un, axis=-1, keepdims=True), 1e-24))
    nli_ref = np.asarray(jnp.dot(un.astype(jnp.bfloat16), corpus[1],
                                 preferred_element_type=jnp.float32))[:, :nc]
    thr_top = float(np.float32(top_rate))
    for i in range(nu):
        cands = [int(v) for v in np.asarray(out["rank_idx"][i]) if v >= 0]
        got_idx = int(out["top_idx"][i, 0])
        got_score = float(out["top_score"][i, 0])
        if not cands:
            assert got_idx == -1 and got_score == 0.0, (i, got_idx, got_score)
            continue
        ss = {c: float(nli_ref[i, c]) for c in cands}
        best = max(ss.values())
        if got_idx == -1:
            assert best < thr_top + 5e-3, (i, best)
            assert got_score == 0.0, (i, got_score)
        else:
            assert got_idx in ss, (i, got_idx, cands)
            assert ss[got_idx] > best - 5e-3, (i, got_idx, ss)
            assert abs(got_score - ss[got_idx]) < 5e-3, (i, got_score, ss[got_idx])


if __name__ == "__main__":
    H, D = 128, 128                        # hidden / embedding dims (demo "encoder" size)
    TOP, RECALL_RATE, TOP_RATE = 3, 0.15, 0.25
    key = jax.random.PRNGKey(0)
    k_a, k_b = jax.random.split(key)

    # Case 1: literal demo scale — single nc block.
    _run_case(k_a, nu=4, nc=16, h=H, d=D, top=TOP,
              recall_rate=RECALL_RATE, top_rate=TOP_RATE, max_tile_nc=512)

    # Case 2: multi-block streaming path (3 nc blocks of 128) to exercise the
    # cross-block top-k accumulator / merge.
    _run_case(k_b, nu=4, nc=300, h=H, d=D, top=TOP,
              recall_rate=RECALL_RATE, top_rate=TOP_RATE, max_tile_nc=128)

    print("KERNEL_OK")
</pallas_src>

<mosaic_0001>
module attributes {stable_mosaic.version = 11 : i64} {
  func.func @_encode_corpus_kernel(%arg0: i32, %arg1: memref<128x128xbf16, #tpu.memory_space<vmem>>, %arg2: memref<128x256xbf16, #tpu.memory_space<vmem>>, %arg3: memref<128x128xbf16, #tpu.memory_space<vmem>>, %arg4: memref<128x128xbf16, #tpu.memory_space<vmem>>) attributes {dimension_semantics = [#tpu.dimension_semantics<parallel>], iteration_bounds = array<i64: 1>, scalar_prefetch = 0 : i64, scratch_operands = 0 : i64, tpu.core_type = #tpu.core_type<tc>, window_params = [{transform_indices = @transform_0, window_bounds = array<i64: 128, 128>}, {pipeline_mode = #tpu.pipeline_mode<synchronous>, transform_indices = @transform_1, window_bounds = array<i64: 128, 256>}, {transform_indices = @transform_2, window_bounds = array<i64: 128, 128>}, {transform_indices = @transform_3, window_bounds = array<i64: 128, 128>}]} {
    %c0 = arith.constant 0 : index
    %c0_0 = arith.constant 0 : index
    %0 = vector.load %arg1[%c0, %c0_0] : memref<128x128xbf16, #tpu.memory_space<vmem>>, vector<128x128xbf16>
    %c0_1 = arith.constant 0 : index
    %c0_2 = arith.constant 0 : index
    %1 = vector.load %arg2[%c0_1, %c0_2] : memref<128x256xbf16, #tpu.memory_space<vmem>>, vector<128x256xbf16>
    %cst = arith.constant dense<0.000000e+00> : vector<128x256xf32>
    %2 = tpu.matmul %0, %1, %cst {dimension_numbers = #tpu.dot_dimension_numbers<[1], [0], [0], [1], [0, 0, 1, 1], [], []>} : vector<128x128xbf16>, vector<128x256xbf16>, vector<128x256xf32> -> vector<128x256xf32>
    %3 = vector.extract_strided_slice %2 {offsets = [0, 0], sizes = [128, 128], strides = [1, 1]} : vector<128x256xf32> to vector<128x128xf32>
    %4 = vector.extract_strided_slice %2 {offsets = [0, 128], sizes = [128, 128], strides = [1, 1]} : vector<128x256xf32> to vector<128x128xf32>
    %5 = arith.mulf %3, %3 : vector<128x128xf32>
    %cst_3 = arith.constant dense<0.000000e+00> : vector<128xf32>
    %6 = vector.multi_reduction <add>, %5, %cst_3 [1] : vector<128x128xf32> to vector<128xf32>
    %7 = vector.shape_cast %6 : vector<128xf32> to vector<128x1xf32>
    %cst_4 = arith.constant 1.000000e-24 : f32
    %8 = vector.broadcast %cst_4 : f32 to vector<128x1xf32>
    %9 = arith.maximumf %7, %8 : vector<128x1xf32>
    %10 = math.rsqrt %9 : vector<128x1xf32>
    %11 = vector.broadcast %10 : vector<128x1xf32> to vector<128x128xf32>
    %12 = arith.mulf %3, %11 : vector<128x128xf32>
    %13 = arith.mulf %4, %4 : vector<128x128xf32>
    %cst_5 = arith.constant dense<0.000000e+00> : vector<128xf32>
    %14 = vector.multi_reduction <add>, %13, %cst_5 [1] : vector<128x128xf32> to vector<128xf32>
    %15 = vector.shape_cast %14 : vector<128xf32> to vector<128x1xf32>
    %cst_6 = arith.constant 1.000000e-24 : f32
    %16 = vector.broadcast %cst_6 : f32 to vector<128x1xf32>
    %17 = arith.maximumf %15, %16 : vector<128x1xf32>
    %18 = math.rsqrt %17 : vector<128x1xf32>
    %19 = vector.broadcast %18 : vector<128x1xf32> to vector<128x128xf32>
    %20 = arith.mulf %4, %19 : vector<128x128xf32>
    %21 = tpu.transpose %12, [1, 0] : vector<128x128xf32> -> vector<128x128xf32>
    %22 = arith.truncf %21 : vector<128x128xf32> to vector<128x128xbf16>
    %c0_7 = arith.constant 0 : index
    %c0_8 = arith.constant 0 : index
    %23 = vector.load %arg3[%c0_7, %c0_8] : memref<128x128xbf16, #tpu.memory_space<vmem>>, vector<128x128xbf16>
    tpu.vector_store %arg3[%c0_7, %c0_8], %22 {strides = array<i32>} : memref<128x128xbf16, #tpu.memory_space<vmem>>, vector<128x128xbf16>,
    %24 = tpu.transpose %20, [1, 0] : vector<128x128xf32> -> vector<128x128xf32>
    %25 = arith.truncf %24 : vector<128x128xf32> to vector<128x128xbf16>
    %c0_9 = arith.constant 0 : index
    %c0_10 = arith.constant 0 : index
    %26 = vector.load %arg4[%c0_9, %c0_10] : memref<128x128xbf16, #tpu.memory_space<vmem>>, vector<128x128xbf16>
    tpu.vector_store %arg4[%c0_9, %c0_10], %25 {strides = array<i32>} : memref<128x128xbf16, #tpu.memory_space<vmem>>, vector<128x128xbf16>,
    return
  }
  func.func @transform_0(%arg0: i32) -> (i32, i32) {
    %c0_i32 = arith.constant 0 : i32
    %c0_i32_0 = arith.constant 0 : i32
    return %arg0, %c0_i32 : i32, i32
  }
  func.func @transform_1(%arg0: i32) -> (i32, i32) {
    %c0_i32 = arith.constant 0 : i32
    %c0_i32_0 = arith.constant 0 : i32
    %c0_i32_1 = arith.constant 0 : i32
    return %c0_i32, %c0_i32_0 : i32, i32
  }
  func.func @transform_2(%arg0: i32) -> (i32, i32) {
    %c0_i32 = arith.constant 0 : i32
    %c0_i32_0 = arith.constant 0 : i32
    return %c0_i32, %arg0 : i32, i32
  }
  func.func @transform_3(%arg0: i32) -> (i32, i32) {
    %c0_i32 = arith.constant 0 : i32
    %c0_i32_0 = arith.constant 0 : i32
    return %c0_i32, %arg0 : i32, i32
  }
}

</mosaic_0001>

<llo_original>
// kernel: encode_corpus.1
$region0: #{encode_corpus.1}
  #allocation0 [shape = 'u32[]', space=smem, size = 0x4, offset = 0x4, fixed_abs, tag = 'smem constant byte address 0x4 - core index']
  #allocation1 [shape = 'u32[144,128]{1,0:T(1,128)}', space=vmem, size = 0x12000, scoped, tag = 'internal scratch']
  %s0 = inlined_call_operand.vmem [shape: bf16[128,128], index: 0, kind: input, shape index: {}]
  %s1 = inlined_call_operand.vmem [shape: bf16[128,256], index: 1, kind: input, shape index: {}]
  %s2 = inlined_call_operand.hbm [shape: bf16[128,128], index: 2, kind: output, shape index: {0}]
  %s3 = inlined_call_operand.hbm [shape: bf16[128,128], index: 3, kind: output, shape index: {1}]
  %4 = xla_tuple %s2, %s3
  %s5 = sld [smem:[#allocation0]]
  $region26: #{encode_corpus.1} parent=0
    _
  %s7 = ssub.s32 1, %s5
  %s8 = scalar_select 0, %s7, %s5
  $region1: #{encode_corpus.1} parent=0
    #allocation2 [shape = 'u8[32768]{0}', space=vmem, size = 0x8000, scoped, tag = 'output window, operand 0, single buffered']
    #allocation3 [shape = 's32[1]{0}', space=sflag, size = 0x4, scoped, tag = 'scoped memory for encode_corpus.1']
    #allocation4 [shape = 'u8[32768]{0}', space=vmem, size = 0x8000, scoped, tag = 'output window, operand 1, single buffered']
    #allocation5 [shape = 's32[1]{0}', space=sflag, size = 0x4, scoped, tag = 'scoped memory for encode_corpus.1']
    %9 = vsyncpa [#allocation3], 0
    %10 = vsyncpa [#allocation5], 0
    // Predicated region
    $region2: #{encode_corpus.1} parent=1 // pred_check
      _
    $region3: #{encode_corpus.1} parent=1 // pred_check_branch
      %12 = sbr.rel (0) target = $region5
    $region4: #{encode_corpus.1} parent=1 // pred_region
      _
    $region5: #{encode_corpus.1} parent=1 // pred_fallthru
      _
    // Predicated region
    $region6: #{encode_corpus.1} parent=1 // pred_check
      _
    $region7: #{encode_corpus.1} parent=1 // pred_check_branch
      %14 = sbr.rel (0) target = $region9
    $region8: #{encode_corpus.1} parent=1 // pred_region
      _
    $region9: #{encode_corpus.1} parent=1 // pred_fallthru
      _
    %v16 = vld [vmem:[%s0] sm:$0xf]
    %v17 = vld [vmem:[%s0 + $0x4] sm:$0xf]
    %v18 = vld [vmem:[%s0 + $0x8] sm:$0xf]
    %v19 = vld [vmem:[%s0 + $0xc] sm:$0xf]
    %v20 = vld [vmem:[%s0 + $0x10] sm:$0xf]
    %v21 = vld [vmem:[%s0 + $0x14] sm:$0xf]
    %v22 = vld [vmem:[%s0 + $0x18] sm:$0xf]
    %v23 = vld [vmem:[%s0 + $0x1c] sm:$0xf]
    %v24 = vld [vmem:[%s0 + $0x20] sm:$0xf]
    %v25 = vld [vmem:[%s0 + $0x24] sm:$0xf]
    %v26 = vld [vmem:[%s0 + $0x28] sm:$0xf]
    %v27 = vld [vmem:[%s0 + $0x2c] sm:$0xf]
    %v28 = vld [vmem:[%s0 + $0x30] sm:$0xf]
    %v29 = vld [vmem:[%s0 + $0x34] sm:$0xf]
    %v30 = vld [vmem:[%s0 + $0x38] sm:$0xf]
    %v31 = vld [vmem:[%s0 + $0x3c] sm:$0xf]
    %v32 = vld [vmem:[%s1] sm:$0xff]
    %v33 = vld [vmem:[%s1 + $0x8] sm:$0xff]
    %v34 = vld [vmem:[%s1 + $0x10] sm:$0xff]
    %v35 = vld [vmem:[%s1 + $0x18] sm:$0xff]
    %v36 = vld [vmem:[%s1 + $0x20] sm:$0xff]
    %v37 = vld [vmem:[%s1 + $0x28] sm:$0xff]
    %v38 = vld [vmem:[%s1 + $0x30] sm:$0xff]
    %v39 = vld [vmem:[%s1 + $0x38] sm:$0xff]
    %v40 = vld [vmem:[%s1 + $0x40] sm:$0xff]
    %v41 = vld [vmem:[%s1 + $0x48] sm:$0xff]
    %v42 = vld [vmem:[%s1 + $0x50] sm:$0xff]
    %v43 = vld [vmem:[%s1 + $0x58] sm:$0xff]
    %v44 = vld [vmem:[%s1 + $0x60] sm:$0xff]
    %v45 = vld [vmem:[%s1 + $0x68] sm:$0xff]
    %v46 = vld [vmem:[%s1 + $0x70] sm:$0xff]
    %v47 = vld [vmem:[%s1 + $0x78] sm:$0xff]
    %v64 = vunpack.c.l.b16 %v16
    %v65 = vunpack.c.l.b16 %v17
    %v66 = vunpack.c.l.b16 %v18
    %v67 = vunpack.c.l.b16 %v19
    %v68 = vunpack.c.l.b16 %v20
    %v69 = vunpack.c.l.b16 %v21
    %v70 = vunpack.c.l.b16 %v22
    %v71 = vunpack.c.l.b16 %v23
    %v72 = vunpack.c.l.b16 %v24
    %v73 = vunpack.c.l.b16 %v25
    %v74 = vunpack.c.l.b16 %v26
    %v75 = vunpack.c.l.b16 %v27
    %v76 = vunpack.c.l.b16 %v28
    %v77 = vunpack.c.l.b16 %v29
    %v78 = vunpack.c.l.b16 %v30
    %v79 = vunpack.c.l.b16 %v31
    %v80 = vpack.c.b16 %v65, %v64
    %v81 = vpack.c.b16 %v67, %v66
    %v82 = vpack.c.b16 %v69, %v68
    %v83 = vpack.c.b16 %v71, %v70
    %v84 = vpack.c.b16 %v73, %v72
    %v85 = vpack.c.b16 %v75, %v74
    %v86 = vpack.c.b16 %v77, %v76
    %v87 = vpack.c.b16 %v79, %v78
    %v112 = vunpack.c.l.b16 %v32
    %v113 = vunpack.c.h.b16 %v32
    %v114 = vunpack.c.l.b16 %v33
    %v115 = vunpack.c.h.b16 %v33
    %v116 = vunpack.c.l.b16 %v34
    %v117 = vunpack.c.h.b16 %v34
    %v118 = vunpack.c.l.b16 %v35
    %v119 = vunpack.c.h.b16 %v35
    %v120 = vunpack.c.l.b16 %v36
    %v121 = vunpack.c.h.b16 %v36
    %v122 = vunpack.c.l.b16 %v37
    %v123 = vunpack.c.h.b16 %v37
    %v124 = vunpack.c.l.b16 %v38
    %v125 = vunpack.c.h.b16 %v38
    %v126 = vunpack.c.l.b16 %v39
    %v127 = vunpack.c.h.b16 %v39
    %v128 = vunpack.c.l.b16 %v40
    %v129 = vunpack.c.h.b16 %v40
    %v130 = vunpack.c.l.b16 %v41
    %v131 = vunpack.c.h.b16 %v41
    %v132 = vunpack.c.l.b16 %v42
    %v133 = vunpack.c.h.b16 %v42
    %v134 = vunpack.c.l.b16 %v43
    %v135 = vunpack.c.h.b16 %v43
    %v136 = vunpack.c.l.b16 %v44
    %v137 = vunpack.c.h.b16 %v44
    %v138 = vunpack.c.l.b16 %v45
    %v139 = vunpack.c.h.b16 %v45
    %v140 = vunpack.c.l.b16 %v46
    %v141 = vunpack.c.h.b16 %v46
    %v142 = vunpack.c.l.b16 %v47
    %v143 = vunpack.c.h.b16 %v47
    %v144 = vpack.c.b16 %v114, %v112
    %v145 = vpack.c.b16 %v115, %v113
    %v146 = vpack.c.b16 %v118, %v116
    %v147 = vpack.c.b16 %v119, %v117
    %v148 = vpack.c.b16 %v122, %v120
    %v149 = vpack.c.b16 %v123, %v121
    %v150 = vpack.c.b16 %v126, %v124
    %v151 = vpack.c.b16 %v127, %v125
    %v152 = vpack.c.b16 %v130, %v128
    %v153 = vpack.c.b16 %v131, %v129
    %v154 = vpack.c.b16 %v134, %v132
    %v155 = vpack.c.b16 %v135, %v133
    %v156 = vpack.c.b16 %v138, %v136
    %v157 = vpack.c.b16 %v139, %v137
    %v158 = vpack.c.b16 %v142, %v140
    %v159 = vpack.c.b16 %v143, %v141
    %176 = vmatprep.subr.bf16.mxu0 %v145
    %177 = vmatpush1.bf16.msra.mxu0 %v144
    %178 = vmatprep.subr.bf16.mxu0 %v147
    %179 = vmatpush1.bf16.msra.mxu0 %v146
    %180 = vmatprep.subr.bf16.mxu0 %v149
    %181 = vmatpush1.bf16.msra.mxu0 %v148
    %182 = vmatprep.subr.bf16.mxu0 %v151
    %183 = vmatpush1.bf16.msra.mxu0 %v150
    %184 = vmatprep.subr.bf16.mxu0 %v153
    %185 = vmatpush1.bf16.msra.mxu0 %v152
    %186 = vmatprep.subr.bf16.mxu0 %v155
    %187 = vmatpush1.bf16.msra.mxu0 %v154
    %188 = vmatprep.subr.bf16.mxu0 %v157
    %189 = vmatpush1.bf16.msra.mxu0 %v156
    %190 = vmatprep.subr.bf16.mxu0 %v159
    %191 = vmatpush1.bf16.msra.mxu0 %v158
    %192 = vmatprep.subr.bf16.mxu0 0
    %193 = vmatpush1.bf16.msra.mxu0 0
    %194 = vmatprep.subr.bf16.mxu0 0
    %195 = vmatpush1.bf16.msra.mxu0 0
    %196 = vmatprep.subr.bf16.mxu0 0
    %197 = vmatpush1.bf16.msra.mxu0 0
    %198 = vmatprep.subr.bf16.mxu0 0
    %199 = vmatpush1.bf16.msra.mxu0 0
    %200 = vmatprep.subr.bf16.mxu0 0
    %201 = vmatpush1.bf16.msra.mxu0 0
    %202 = vmatprep.subr.bf16.mxu0 0
    %203 = vmatpush1.bf16.msra.mxu0 0
    %204 = vmatprep.subr.bf16.mxu0 0
    %205 = vmatpush1.bf16.msra.mxu0 0
    %206 = vmatprep.subr.bf16.mxu0 0
    %207 = vmatpush1.bf16.msra.mxu0 0
    %208 = vmatprep.mubr.bf16.mxu0 0
    %209 = vmatmul.mubr.bf16.gmra.mrb[0].mxu0 %v80
    %v210 = vpop.f32.mrb[0].mxu0
    %v211 = vadd.f32 0.0, %v210
    %v212 = vpop.f32.mrb[0].mxu0
    %v213 = vadd.f32 0.0, %v212
    %v214 = vpop.f32.mrb[0].mxu0
    %v215 = vadd.f32 0.0, %v214
    %v216 = vpop.f32.mrb[0].mxu0
    %v217 = vadd.f32 0.0, %v216
    %218 = vmatprep.mubr.bf16.mxu0 0
    %219 = vmatmul.mubr.bf16.gmra.mrb[0].mxu0 %v81
    %v220 = vpop.f32.mrb[0].mxu0
    %v221 = vadd.f32 0.0, %v220
    %v222 = vpop.f32.mrb[0].mxu0
    %v223 = vadd.f32 0.0, %v222
    %v224 = vpop.f32.mrb[0].mxu0
    %v225 = vadd.f32 0.0, %v224
    %v226 = vpop.f32.mrb[0].mxu0
    %v227 = vadd.f32 0.0, %v226
    %228 = vmatprep.mubr.bf16.mxu0 0
    %229 = vmatmul.mubr.bf16.gmra.mrb[0].mxu0 %v82
    %v230 = vpop.f32.mrb[0].mxu0
    %v231 = vadd.f32 0.0, %v230
    %v232 = vpop.f32.mrb[0].mxu0
    %v233 = vadd.f32 0.0, %v232
    %v234 = vpop.f32.mrb[0].mxu0
    %v235 = vadd.f32 0.0, %v234
    %v236 = vpop.f32.mrb[0].mxu0
    %v237 = vadd.f32 0.0, %v236
    %238 = vmatprep.mubr.bf16.mxu0 0
    %239 = vmatmul.mubr.bf16.gmra.mrb[0].mxu0 %v83
    %v240 = vpop.f32.mrb[0].mxu0
    %v241 = vadd.f32 0.0, %v240
    %v242 = vpop.f32.mrb[0].mxu0
    %v243 = vadd.f32 0.0, %v242
    %v244 = vpop.f32.mrb[0].mxu0
    %v245 = vadd.f32 0.0, %v244
    %v246 = vpop.f32.mrb[0].mxu0
    %v247 = vadd.f32 0.0, %v246
    %248 = vmatprep.mubr.bf16.mxu0 0
    %249 = vmatmul.mubr.bf16.gmra.mrb[0].mxu0 %v84
    %v250 = vpop.f32.mrb[0].mxu0
    %v251 = vadd.f32 0.0, %v250
    %v252 = vpop.f32.mrb[0].mxu0
    %v253 = vadd.f32 0.0, %v252
    %v254 = vpop.f32.mrb[0].mxu0
    %v255 = vadd.f32 0.0, %v254
    %v256 = vpop.f32.mrb[0].mxu0
    %v257 = vadd.f32 0.0, %v256
    %258 = vmatprep.mubr.bf16.mxu0 0
    %259 = vmatmul.mubr.bf16.gmra.mrb[0].mxu0 %v85
    %v260 = vpop.f32.mrb[0].mxu0
    %v261 = vadd.f32 0.0, %v260
    %v262 = vpop.f32.mrb[0].mxu0
    %v263 = vadd.f32 0.0, %v262
    %v264 = vpop.f32.mrb[0].mxu0
    %v265 = vadd.f32 0.0, %v264
    %v266 = vpop.f32.mrb[0].mxu0
    %v267 = vadd.f32 0.0, %v266
    %268 = vmatprep.mubr.bf16.mxu0 0
    %269 = vmatmul.mubr.bf16.gmra.mrb[0].mxu0 %v86
    %v270 = vpop.f32.mrb[0].mxu0
    %v271 = vadd.f32 0.0, %v270
    %v272 = vpop.f32.mrb[0].mxu0
    %v273 = vadd.f32 0.0, %v272
    %v274 = vpop.f32.mrb[0].mxu0
    %v275 = vadd.f32 0.0, %v274
    %v276 = vpop.f32.mrb[0].mxu0
    %v277 = vadd.f32 0.0, %v276
    %278 = vmatprep.mubr.bf16.mxu0 0
    %279 = vmatmul.mubr.bf16.gmra.mrb[0].mxu0 %v87
    %v280 = vpop.f32.mrb[0].mxu0
    %v281 = vadd.f32 0.0, %v280
    %v282 = vpop.f32.mrb[0].mxu0
    %v283 = vadd.f32 0.0, %v282
    %v284 = vpop.f32.mrb[0].mxu0
    %v285 = vadd.f32 0.0, %v284
    %v286 = vpop.f32.mrb[0].mxu0
    %v287 = vadd.f32 0.0, %v286
    %288 = vdwg.mxu0
    %v289 = vmul.f32 %v211, %v211
    %v290 = vmul.f32 %v215, %v215
    %v291 = vmul.f32 %v221, %v221
    %v292 = vmul.f32 %v225, %v225
    %v293 = vmul.f32 %v231, %v231
    %v294 = vmul.f32 %v235, %v235
    %v295 = vmul.f32 %v241, %v241
    %v296 = vmul.f32 %v245, %v245
    %v297 = vmul.f32 %v251, %v251
    %v298 = vmul.f32 %v255, %v255
    %v299 = vmul.f32 %v261, %v261
    %v300 = vmul.f32 %v265, %v265
    %v301 = vmul.f32 %v271, %v271
    %v302 = vmul.f32 %v275, %v275
    %v303 = vmul.f32 %v281, %v281
    %v304 = vmul.f32 %v285, %v285
    %305 = vadd.xlane.f32.xlu0 %v289
    %v306 = vpop.xlane.xlu0 %305
    %307 = vadd.xlane.f32.xlu0 %v290
    %v308 = vpop.xlane.xlu0 %307
    %309 = vadd.xlane.f32.xlu0 %v291
    %v310 = vpop.xlane.xlu0 %309
    %311 = vadd.xlane.f32.xlu0 %v292
    %v312 = vpop.xlane.xlu0 %311
    %313 = vadd.xlane.f32.xlu0 %v293
    %v314 = vpop.xlane.xlu0 %313
    %315 = vadd.xlane.f32.xlu0 %v294
    %v316 = vpop.xlane.xlu0 %315
    %317 = vadd.xlane.f32.xlu0 %v295
    %v318 = vpop.xlane.xlu0 %317
    %319 = vadd.xlane.f32.xlu0 %v296
    %v320 = vpop.xlane.xlu0 %319
    %321 = vadd.xlane.f32.xlu0 %v297
    %v322 = vpop.xlane.xlu0 %321
    %323 = vadd.xlane.f32.xlu0 %v298
    %v324 = vpop.xlane.xlu0 %323
    %325 = vadd.xlane.f32.xlu0 %v299
    %v326 = vpop.xlane.xlu0 %325
    %327 = vadd.xlane.f32.xlu0 %v300
    %v328 = vpop.xlane.xlu0 %327
    %329 = vadd.xlane.f32.xlu0 %v301
    %v330 = vpop.xlane.xlu0 %329
    %331 = vadd.xlane.f32.xlu0 %v302
    %v332 = vpop.xlane.xlu0 %331
    %333 = vadd.xlane.f32.xlu0 %v303
    %v334 = vpop.xlane.xlu0 %333
    %335 = vadd.xlane.f32.xlu0 %v304
    %v336 = vpop.xlane.xlu0 %335
    %v337 = vmax.f32 %v306, 1e-24
    %v338 = vmax.f32 %v308, 1e-24
    %v339 = vmax.f32 %v310, 1e-24
    %v340 = vmax.f32 %v312, 1e-24
    %v341 = vmax.f32 %v314, 1e-24
    %v342 = vmax.f32 %v316, 1e-24
    %v343 = vmax.f32 %v318, 1e-24
    %v344 = vmax.f32 %v320, 1e-24
    %v345 = vmax.f32 %v322, 1e-24
    %v346 = vmax.f32 %v324, 1e-24
    %v347 = vmax.f32 %v326, 1e-24
    %v348 = vmax.f32 %v328, 1e-24
    %v349 = vmax.f32 %v330, 1e-24
    %v350 = vmax.f32 %v332, 1e-24
    %v351 = vmax.f32 %v334, 1e-24
    %v352 = vmax.f32 %v336, 1e-24
    %v353 = vrsqrt.pop %v337
    %v354 = vrsqrt.pop %v338
    %v355 = vrsqrt.pop %v339
    %v356 = vrsqrt.pop %v340
    %v357 = vrsqrt.pop %v341
    %v358 = vrsqrt.pop %v342
    %v359 = vrsqrt.pop %v343
    %v360 = vrsqrt.pop %v344
    %v361 = vrsqrt.pop %v345
    %v362 = vrsqrt.pop %v346
    %v363 = vrsqrt.pop %v347
    %v364 = vrsqrt.pop %v348
    %v365 = vrsqrt.pop %v349
    %v366 = vrsqrt.pop %v350
    %v367 = vrsqrt.pop %v351
    %v368 = vrsqrt.pop %v352
    %v369 = vmul.f32 %v211, %v353
    %v370 = vmul.f32 %v215, %v354
    %v371 = vmul.f32 %v221, %v355
    %v372 = vmul.f32 %v225, %v356
    %v373 = vmul.f32 %v231, %v357
    %v374 = vmul.f32 %v235, %v358
    %v375 = vmul.f32 %v241, %v359
    %v376 = vmul.f32 %v245, %v360
    %v377 = vmul.f32 %v251, %v361
    %v378 = vmul.f32 %v255, %v362
    %v379 = vmul.f32 %v261, %v363
    %v380 = vmul.f32 %v265, %v364
    %v381 = vmul.f32 %v271, %v365
    %v382 = vmul.f32 %v275, %v366
    %v383 = vmul.f32 %v281, %v367
    %v384 = vmul.f32 %v285, %v368
    %v385 = vmul.f32 %v213, %v213
    %v386 = vmul.f32 %v217, %v217
    %v387 = vmul.f32 %v223, %v223
    %v388 = vmul.f32 %v227, %v227
    %v389 = vmul.f32 %v233, %v233
    %v390 = vmul.f32 %v237, %v237
    %v391 = vmul.f32 %v243, %v243
    %v392 = vmul.f32 %v247, %v247
    %v393 = vmul.f32 %v253, %v253
    %v394 = vmul.f32 %v257, %v257
    %v395 = vmul.f32 %v263, %v263
    %v396 = vmul.f32 %v267, %v267
    %v397 = vmul.f32 %v273, %v273
    %v398 = vmul.f32 %v277, %v277
    %v399 = vmul.f32 %v283, %v283
    %v400 = vmul.f32 %v287, %v287
    %401 = vadd.xlane.f32.xlu0 %v385
    %v402 = vpop.xlane.xlu0 %401
    %403 = vadd.xlane.f32.xlu0 %v386
    %v404 = vpop.xlane.xlu0 %403
    %405 = vadd.xlane.f32.xlu0 %v387
    %v406 = vpop.xlane.xlu0 %405
    %407 = vadd.xlane.f32.xlu0 %v388
    %v408 = vpop.xlane.xlu0 %407
    %409 = vadd.xlane.f32.xlu0 %v389
    %v410 = vpop.xlane.xlu0 %409
    %411 = vadd.xlane.f32.xlu0 %v390
    %v412 = vpop.xlane.xlu0 %411
    %413 = vadd.xlane.f32.xlu0 %v391
    %v414 = vpop.xlane.xlu0 %413
    %415 = vadd.xlane.f32.xlu0 %v392
    %v416 = vpop.xlane.xlu0 %415
    %417 = vadd.xlane.f32.xlu0 %v393
    %v418 = vpop.xlane.xlu0 %417
    %419 = vadd.xlane.f32.xlu0 %v394
    %v420 = vpop.xlane.xlu0 %419
    %421 = vadd.xlane.f32.xlu0 %v395
    %v422 = vpop.xlane.xlu0 %421
    %423 = vadd.xlane.f32.xlu0 %v396
    %v424 = vpop.xlane.xlu0 %423
    %425 = vadd.xlane.f32.xlu0 %v397
    %v426 = vpop.xlane.xlu0 %425
    %427 = vadd.xlane.f32.xlu0 %v398
    %v428 = vpop.xlane.xlu0 %427
    %429 = vadd.xlane.f32.xlu0 %v399
    %v430 = vpop.xlane.xlu0 %429
    %431 = vadd.xlane.f32.xlu0 %v400
    %v432 = vpop.xlane.xlu0 %431
    %v433 = vmax.f32 %v402, 1e-24
    %v434 = vmax.f32 %v404, 1e-24
    %v435 = vmax.f32 %v406, 1e-24
    %v436 = vmax.f32 %v408, 1e-24
    %v437 = vmax.f32 %v410, 1e-24
    %v438 = vmax.f32 %v412, 1e-24
    %v439 = vmax.f32 %v414, 1e-24
    %v440 = vmax.f32 %v416, 1e-24
    %v441 = vmax.f32 %v418, 1e-24
    %v442 = vmax.f32 %v420, 1e-24
    %v443 = vmax.f32 %v422, 1e-24
    %v444 = vmax.f32 %v424, 1e-24
    %v445 = vmax.f32 %v426, 1e-24
    %v446 = vmax.f32 %v428, 1e-24
    %v447 = vmax.f32 %v430, 1e-24
    %v448 = vmax.f32 %v432, 1e-24
    %v449 = vrsqrt.pop %v433
    %v450 = vrsqrt.pop %v434
    %v451 = vrsqrt.pop %v435
    %v452 = vrsqrt.pop %v436
    %v453 = vrsqrt.pop %v437
    %v454 = vrsqrt.pop %v438
    %v455 = vrsqrt.pop %v439
    %v456 = vrsqrt.pop %v440
    %v457 = vrsqrt.pop %v441
    %v458 = vrsqrt.pop %v442
    %v459 = vrsqrt.pop %v443
    %v460 = vrsqrt.pop %v444
    %v461 = vrsqrt.pop %v445
    %v462 = vrsqrt.pop %v446
    %v463 = vrsqrt.pop %v447
    %v464 = vrsqrt.pop %v448
    %v465 = vmul.f32 %v213, %v449
    %v466 = vmul.f32 %v217, %v450
    %v467 = vmul.f32 %v223, %v451
    %v468 = vmul.f32 %v227, %v452
    %v469 = vmul.f32 %v233, %v453
    %v470 = vmul.f32 %v237, %v454
    %v471 = vmul.f32 %v243, %v455
    %v472 = vmul.f32 %v247, %v456
    %v473 = vmul.f32 %v253, %v457
    %v474 = vmul.f32 %v257, %v458
    %v475 = vmul.f32 %v263, %v459
    %v476 = vmul.f32 %v267, %v460
    %v477 = vmul.f32 %v273, %v461
    %v478 = vmul.f32 %v277, %v462
    %v479 = vmul.f32 %v283, %v463
    %v480 = vmul.f32 %v287, %v464
    %481 = vxpose.xlu0.b32.start [1/16] %v369, 128
    %482 = vxpose.xlu0.b32.cont [2/16] %v370, 128
    %483 = vxpose.xlu0.b32.cont [3/16] %v371, 128
    %484 = vxpose.xlu0.b32.cont [4/16] %v372, 128
    %485 = vxpose.xlu0.b32.cont [5/16] %v373, 128
    %486 = vxpose.xlu0.b32.cont [6/16] %v374, 128
    %487 = vxpose.xlu0.b32.cont [7/16] %v375, 128
    %488 = vxpose.xlu0.b32.cont [8/16] %v376, 128
    %489 = vxpose.xlu0.b32.cont [9/16] %v377, 128
    %490 = vxpose.xlu0.b32.cont [10/16] %v378, 128
    %491 = vxpose.xlu0.b32.cont [11/16] %v379, 128
    %492 = vxpose.xlu0.b32.cont [12/16] %v380, 128
    %493 = vxpose.xlu0.b32.cont [13/16] %v381, 128
    %494 = vxpose.xlu0.b32.cont [14/16] %v382, 128
    %495 = vxpose.xlu0.b32.cont [15/16] %v383, 128
    %496 = vxpose.xlu0.b32.end [16/16] %v384, 128
    %v497 = vpop.trf.xlu0
    %v498 = vpop.trf.xlu0
    %v499 = vpop.trf.xlu0
    %v500 = vpop.trf.xlu0
    %v501 = vpop.trf.xlu0
    %v502 = vpop.trf.xlu0
    %v503 = vpop.trf.xlu0
    %v504 = vpop.trf.xlu0
    %v505 = vpop.trf.xlu0
    %v506 = vpop.trf.xlu0
    %v507 = vpop.trf.xlu0
    %v508 = vpop.trf.xlu0
    %v509 = vpop.trf.xlu0
    %v510 = vpop.trf.xlu0
    %v511 = vpop.trf.xlu0
    %v512 = vpop.trf.xlu0
    %v513 = vpack.c.bf16 %v498, %v497
    %v514 = vpack.c.bf16 %v500, %v499
    %v515 = vpack.c.bf16 %v502, %v501
    %v516 = vpack.c.bf16 %v504, %v503
    %v517 = vpack.c.bf16 %v506, %v505
    %v518 = vpack.c.bf16 %v508, %v507
    %v519 = vpack.c.bf16 %v510, %v509
    %v520 = vpack.c.bf16 %v512, %v511
    %v529 = vunpack.c.l.b16 %v513
    %v530 = vunpack.c.h.b16 %v513
    %v531 = vunpack.c.l.b16 %v514
    %v532 = vunpack.c.h.b16 %v514
    %v533 = vunpack.c.l.b16 %v515
    %v534 = vunpack.c.h.b16 %v515
    %v535 = vunpack.c.l.b16 %v516
    %v536 = vunpack.c.h.b16 %v516
    %v537 = vunpack.c.l.b16 %v517
    %v538 = vunpack.c.h.b16 %v517
    %v539 = vunpack.c.l.b16 %v518
    %v540 = vunpack.c.h.b16 %v518
    %v541 = vunpack.c.l.b16 %v519
    %v542 = vunpack.c.h.b16 %v519
    %v543 = vunpack.c.l.b16 %v520
    %v544 = vunpack.c.h.b16 %v520
    %v545 = vpack.c.b16 %v529, %v529
    %v546 = vpack.c.b16 %v530, %v530
    %v547 = vpack.c.b16 %v531, %v531
    %v548 = vpack.c.b16 %v532, %v532
    %v549 = vpack.c.b16 %v533, %v533
    %v550 = vpack.c.b16 %v534, %v534
    %v551 = vpack.c.b16 %v535, %v535
    %v552 = vpack.c.b16 %v536, %v536
    %v553 = vpack.c.b16 %v537, %v537
    %v554 = vpack.c.b16 %v538, %v538
    %v555 = vpack.c.b16 %v539, %v539
    %v556 = vpack.c.b16 %v540, %v540
    %v557 = vpack.c.b16 %v541, %v541
    %v558 = vpack.c.b16 %v542, %v542
    %v559 = vpack.c.b16 %v543, %v543
    %v560 = vpack.c.b16 %v544, %v544
    %577 = vst [vmem:[#allocation2] sm:$0xf] %v545
    %578 = vst [vmem:[#allocation2 + $0x4] sm:$0xf] %v546
    %579 = vst [vmem:[#allocation2 + $0x8] sm:$0xf] %v547
    %580 = vst [vmem:[#allocation2 + $0xc] sm:$0xf] %v548
    %581 = vst [vmem:[#allocation2 + $0x10] sm:$0xf] %v549
    %582 = vst [vmem:[#allocation2 + $0x14] sm:$0xf] %v550
    %583 = vst [vmem:[#allocation2 + $0x18] sm:$0xf] %v551
    %584 = vst [vmem:[#allocation2 + $0x1c] sm:$0xf] %v552
    %585 = vst [vmem:[#allocation2 + $0x20] sm:$0xf] %v553
    %586 = vst [vmem:[#allocation2 + $0x24] sm:$0xf] %v554
    %587 = vst [vmem:[#allocation2 + $0x28] sm:$0xf] %v555
    %588 = vst [vmem:[#allocation2 + $0x2c] sm:$0xf] %v556
    %589 = vst [vmem:[#allocation2 + $0x30] sm:$0xf] %v557
    %590 = vst [vmem:[#allocation2 + $0x34] sm:$0xf] %v558
    %591 = vst [vmem:[#allocation2 + $0x38] sm:$0xf] %v559
    %592 = vst [vmem:[#allocation2 + $0x3c] sm:$0xf] %v560
    %593 = vxpose.xlu0.b32.start [1/16] %v465, 128
    %594 = vxpose.xlu0.b32.cont [2/16] %v466, 128
    %595 = vxpose.xlu0.b32.cont [3/16] %v467, 128
    %596 = vxpose.xlu0.b32.cont [4/16] %v468, 128
    %597 = vxpose.xlu0.b32.cont [5/16] %v469, 128
    %598 = vxpose.xlu0.b32.cont [6/16] %v470, 128
    %599 = vxpose.xlu0.b32.cont [7/16] %v471, 128
    %600 = vxpose.xlu0.b32.cont [8/16] %v472, 128
    %601 = vxpose.xlu0.b32.cont [9/16] %v473, 128
    %602 = vxpose.xlu0.b32.cont [10/16] %v474, 128
    %603 = vxpose.xlu0.b32.cont [11/16] %v475, 128
    %604 = vxpose.xlu0.b32.cont [12/16] %v476, 128
    %605 = vxpose.xlu0.b32.cont [13/16] %v477, 128
    %606 = vxpose.xlu0.b32.cont [14/16] %v478, 128
    %607 = vxpose.xlu0.b32.cont [15/16] %v479, 128
    %608 = vxpose.xlu0.b32.end [16/16] %v480, 128
    %v609 = vpop.trf.xlu0
    %v610 = vpop.trf.xlu0
    %v611 = vpop.trf.xlu0
    %v612 = vpop.trf.xlu0
    %v613 = vpop.trf.xlu0
    %v614 = vpop.trf.xlu0
    %v615 = vpop.trf.xlu0
    %v616 = vpop.trf.xlu0
    %v617 = vpop.trf.xlu0
    %v618 = vpop.trf.xlu0
    %v619 = vpop.trf.xlu0
    %v620 = vpop.trf.xlu0
    %v621 = vpop.trf.xlu0
    %v622 = vpop.trf.xlu0
    %v623 = vpop.trf.xlu0
    %v624 = vpop.trf.xlu0
    %v625 = vpack.c.bf16 %v610, %v609
    %v626 = vpack.c.bf16 %v612, %v611
    %v627 = vpack.c.bf16 %v614, %v613
    %v628 = vpack.c.bf16 %v616, %v615
    %v629 = vpack.c.bf16 %v618, %v617
    %v630 = vpack.c.bf16 %v620, %v619
    %v631 = vpack.c.bf16 %v622, %v621
    %v632 = vpack.c.bf16 %v624, %v623
    %v641 = vunpack.c.l.b16 %v625
    %v642 = vunpack.c.h.b16 %v625
    %v643 = vunpack.c.l.b16 %v626
    %v644 = vunpack.c.h.b16 %v626
    %v645 = vunpack.c.l.b16 %v627
    %v646 = vunpack.c.h.b16 %v627
    %v647 = vunpack.c.l.b16 %v628
    %v648 = vunpack.c.h.b16 %v628
    %v649 = vunpack.c.l.b16 %v629
    %v650 = vunpack.c.h.b16 %v629
    %v651 = vunpack.c.l.b16 %v630
    %v652 = vunpack.c.h.b16 %v630
    %v653 = vunpack.c.l.b16 %v631
    %v654 = vunpack.c.h.b16 %v631
    %v655 = vunpack.c.l.b16 %v632
    %v656 = vunpack.c.h.b16 %v632
    %v657 = vpack.c.b16 %v641, %v641
    %v658 = vpack.c.b16 %v642, %v642
    %v659 = vpack.c.b16 %v643, %v643
    %v660 = vpack.c.b16 %v644, %v644
    %v661 = vpack.c.b16 %v645, %v645
    %v662 = vpack.c.b16 %v646, %v646
    %v663 = vpack.c.b16 %v647, %v647
    %v664 = vpack.c.b16 %v648, %v648
    %v665 = vpack.c.b16 %v649, %v649
    %v666 = vpack.c.b16 %v650, %v650
    %v667 = vpack.c.b16 %v651, %v651
    %v668 = vpack.c.b16 %v652, %v652
    %v669 = vpack.c.b16 %v653, %v653
    %v670 = vpack.c.b16 %v654, %v654
    %v671 = vpack.c.b16 %v655, %v655
    %v672 = vpack.c.b16 %v656, %v656
    %689 = vst [vmem:[#allocation4] sm:$0xf] %v657
    %690 = vst [vmem:[#allocation4 + $0x4] sm:$0xf] %v658
    %691 = vst [vmem:[#allocation4 + $0x8] sm:$0xf] %v659
    %692 = vst [vmem:[#allocation4 + $0xc] sm:$0xf] %v660
    %693 = vst [vmem:[#allocation4 + $0x10] sm:$0xf] %v661
    %694 = vst [vmem:[#allocation4 + $0x14] sm:$0xf] %v662
    %695 = vst [vmem:[#allocation4 + $0x18] sm:$0xf] %v663
    %696 = vst [vmem:[#allocation4 + $0x1c] sm:$0xf] %v664
    %697 = vst [vmem:[#allocation4 + $0x20] sm:$0xf] %v665
    %698 = vst [vmem:[#allocation4 + $0x24] sm:$0xf] %v666
    %699 = vst [vmem:[#allocation4 + $0x28] sm:$0xf] %v667
    %700 = vst [vmem:[#allocation4 + $0x2c] sm:$0xf] %v668
    %701 = vst [vmem:[#allocation4 + $0x30] sm:$0xf] %v669
    %702 = vst [vmem:[#allocation4 + $0x34] sm:$0xf] %v670
    %703 = vst [vmem:[#allocation4 + $0x38] sm:$0xf] %v671
    %704 = vst [vmem:[#allocation4 + $0x3c] sm:$0xf] %v672
    // Predicated region
    $region10: #{encode_corpus.1} parent=1 // pred_check
      _
    $region11: #{encode_corpus.1} parent=1 // pred_check_branch
      %706 = sbr.rel (0) target = $region13
    $region12: #{encode_corpus.1} parent=1 // pred_region
      %s708 = ssub.s32 1024, 1024
      %709 = vsyncadd [#allocation3], %s708
      %s710 = sshll.u32 [#allocation2], 4
      %s711 = int_to_ptr.vmem [resolvable:$true] %s710
      %716 = dma.vmem_to_hbm [thread:$0]  %s711, 1024, %s2, [#allocation3], 64, 64, 4
    $region13: #{encode_corpus.1} parent=1 // pred_fallthru
      _
    // Predicated region
    $region14: #{encode_corpus.1} parent=1 // pred_check
      _
    $region15: #{encode_corpus.1} parent=1 // pred_check_branch
      %718 = sbr.rel (0) target = $region17
    $region16: #{encode_corpus.1} parent=1 // pred_region
      %s720 = ssub.s32 1024, 1024
      %721 = vsyncadd [#allocation5], %s720
      %s722 = sshll.u32 [#allocation4], 4
      %s723 = int_to_ptr.vmem [resolvable:$true] %s722
      %728 = dma.vmem_to_hbm [thread:$0]  %s723, 1024, %s3, [#allocation5], 64, 64, 4
    $region17: #{encode_corpus.1} parent=1 // pred_fallthru
      _
    // Predicated region
    $region18: #{encode_corpus.1} parent=1 // pred_check
      _
    $region19: #{encode_corpus.1} parent=1 // pred_check_branch
      %730 = sbr.rel (0) target = $region21
    $region20: #{encode_corpus.1} parent=1 // pred_region
      %731 = dma.done [#allocation3], 1024
    $region21: #{encode_corpus.1} parent=1 // pred_fallthru
      _
    // Predicated region
    $region22: #{encode_corpus.1} parent=1 // pred_check
      _
    $region23: #{encode_corpus.1} parent=1 // pred_check_branch
      %733 = sbr.rel (0) target = $region25
    $region24: #{encode_corpus.1} parent=1 // pred_region
      %734 = dma.done [#allocation5], 1024
    $region25: #{encode_corpus.1} parent=1 // pred_fallthru
      _
    %735 = vsyncpa [#allocation3], 1
    %736 = vsyncpa [#allocation5], 1

</llo_original>
